<compile_context>
chip_gen: v7x
topology: tpu7x:2x2x1
jax: 0.10.0
libtpu: 0.0.40
codegen_flags: <defaults>
</compile_context>

<pallas_src>
import functools
import math

import jax
import jax.numpy as jnp
from jax import lax
from jax.experimental import pallas as pl
from jax.experimental.pallas import tpu as pltpu


def _sublane(dtype):
    return {4: 8, 2: 16, 1: 32}.get(jnp.dtype(dtype).itemsize, 8)


def _round_up(x, m):
    return ((x + m - 1) // m) * m


def _budgets():
    """(per-block input byte budget, vmem_limit_bytes), per TPU generation."""
    vmem_cap = None
    try:
        vmem_cap = int(pltpu.get_tpu_info().vmem_capacity_bytes)
    except Exception:
        vmem_cap = None
    if vmem_cap is not None and vmem_cap > 96 * 1024 * 1024:
        # v5e / v6e: 128 MiB physical VMEM -> bigger blocks, higher limit.
        return 12 * 1024 * 1024, 64 * 1024 * 1024
    # v7x (64 MiB per TensorCore) or unknown generation: stay conservative.
    return 10 * 1024 * 1024, 44 * 1024 * 1024


# ----------------------------------------------------------------------------
# Path A: reduce the lane (last) axis of a (K, R) matrix.
# ----------------------------------------------------------------------------
def _mean_rows_kernel(x_ref, o_ref, *, scale):
    # x_ref: (TM, R).  Lane-axis reduction, f32 accumulation.
    s = jnp.sum(x_ref[...], axis=-1, keepdims=True, dtype=jnp.float32)
    o_ref[...] = (s * scale).astype(o_ref.dtype)


def _row_mean_single(x2d, count, block_budget, vmem_limit):
    """(K, R) -> (K,) row means; full R extent in one block."""
    K, R = x2d.shape
    itemsize = x2d.dtype.itemsize
    sub = _sublane(x2d.dtype)
    # Padded VMEM bytes per row: input lanes round to 128, output (TM,1) too.
    row_bytes = (_round_up(R, 128) + 128) * itemsize
    TM = max(sub, (block_budget // row_bytes) // sub * sub)
    TM = min(TM, _round_up(K, sub))
    if pl.cdiv(K, TM) < 2 and K > sub:
        TM = _round_up(pl.cdiv(K, 2), sub)   # keep both v7x TensorCores busy
    kernel = functools.partial(_mean_rows_kernel, scale=1.0 / float(count))
    out = pl.pallas_call(
        kernel,
        out_shape=jax.ShapeDtypeStruct((K, 1), x2d.dtype),
        grid_spec=pltpu.PrefetchScalarGridSpec(
            num_scalar_prefetch=0,
            grid=(pl.cdiv(K, TM),),
            in_specs=[pl.BlockSpec((TM, R), lambda i: (i, 0))],
            out_specs=pl.BlockSpec((TM, 1), lambda i: (i, 0)),
        ),
        compiler_params=pltpu.CompilerParams(
            dimension_semantics=("parallel",),
            vmem_limit_bytes=vmem_limit),
    )(x2d)
    return out[:, 0]


def _mean_rows_acc_kernel(x_ref, o_ref, acc_ref, *, scale, r_total, tr, need_mask):
    # Chunked-R streaming: accumulate into resident f32 VMEM scratch.
    k = pl.program_id(1)

    @pl.when(k == 0)
    def _():
        acc_ref[...] = jnp.zeros_like(acc_ref)

    x = x_ref[...]
    if need_mask:
        # Last R-chunk over-runs the true column extent: zero the padding so
        # it never enters the accumulator.
        col = k * tr + lax.broadcasted_iota(jnp.int32, x.shape, 1)
        x = jnp.where(col < r_total, x, jnp.zeros_like(x))
    acc_ref[...] += jnp.sum(x, axis=-1, keepdims=True, dtype=jnp.float32)

    @pl.when(k == pl.num_programs(1) - 1)
    def _():
        o_ref[...] = (acc_ref[...] * scale).astype(o_ref.dtype)


def _row_mean_chunked(x2d, count, block_budget, vmem_limit):
    """(K, R) -> (K,) row means when R is too large for a single block."""
    K, R = x2d.shape
    itemsize = x2d.dtype.itemsize
    sub = _sublane(x2d.dtype)
    target_tm = 8 * sub
    TR = (block_budget // (target_tm * itemsize)) // 128 * 128
    TR = max(128, min(TR, _round_up(R, 128)))
    per_row = (TR + 128) * itemsize + 128 * 4    # input + output + f32 acc
    TM = max(sub, (block_budget // per_row) // sub * sub)
    TM = min(TM, _round_up(K, sub))
    if pl.cdiv(K, TM) < 2 and K > sub:
        TM = _round_up(pl.cdiv(K, 2), sub)
    need_mask = (R % TR) != 0
    kernel = functools.partial(_mean_rows_acc_kernel, scale=1.0 / float(count),
                               r_total=R, tr=TR, need_mask=need_mask)
    out = pl.pallas_call(
        kernel,
        out_shape=jax.ShapeDtypeStruct((K, 1), x2d.dtype),
        grid_spec=pltpu.PrefetchScalarGridSpec(
            num_scalar_prefetch=0,
            grid=(pl.cdiv(K, TM), pl.cdiv(R, TR)),
            in_specs=[pl.BlockSpec((TM, TR), lambda i, k: (i, k))],
            out_specs=pl.BlockSpec((TM, 1), lambda i, k: (i, 0)),
            scratch_shapes=[pltpu.VMEM((TM, 1), jnp.float32)],
        ),
        compiler_params=pltpu.CompilerParams(
            dimension_semantics=("parallel", "arbitrary"),
            vmem_limit_bytes=vmem_limit),
    )(x2d)
    return out[:, 0]


def _mean_folded_kernel(x_ref, o_ref, *, r, p, scale):
    # x_ref: (TM, p*r) lane-dense block holding p kept rows of r columns each.
    # Sum every group of r adjacent lanes with a tiny MXU matmul against a
    # 0/1 block selector -> (TM, p) lane-width-p output.
    x = x_ref[...]
    pr = p * r
    j = lax.broadcasted_iota(jnp.int32, (pr, p), 0)
    q = lax.broadcasted_iota(jnp.int32, (pr, p), 1)
    sel = ((j >= q * r) & (j < (q + 1) * r)).astype(x.dtype)
    s = jnp.dot(x, sel, preferred_element_type=jnp.float32,
                precision=lax.Precision.HIGHEST)
    o_ref[...] = (s * scale).astype(o_ref.dtype)


def _row_mean_folded(x2d, r, p, count, block_budget, vmem_limit):
    """(K//p, p*r) -> (K//p, p) grouped row means for tiny trailing r."""
    Kp, PR = x2d.shape
    itemsize = x2d.dtype.itemsize
    sub = _sublane(x2d.dtype)
    row_bytes = (_round_up(PR, 128) + 128) * itemsize
    TM = max(sub, (block_budget // row_bytes) // sub * sub)
    TM = min(TM, _round_up(Kp, sub))
    if pl.cdiv(Kp, TM) < 2 and Kp > sub:
        TM = _round_up(pl.cdiv(Kp, 2), sub)
    kernel = functools.partial(_mean_folded_kernel, r=r, p=p,
                               scale=1.0 / float(count))
    return pl.pallas_call(
        kernel,
        out_shape=jax.ShapeDtypeStruct((Kp, p), x2d.dtype),
        grid_spec=pltpu.PrefetchScalarGridSpec(
            num_scalar_prefetch=0,
            grid=(pl.cdiv(Kp, TM),),
            in_specs=[pl.BlockSpec((TM, PR), lambda i: (i, 0))],
            out_specs=pl.BlockSpec((TM, p), lambda i: (i, 0)),
        ),
        compiler_params=pltpu.CompilerParams(
            dimension_semantics=("parallel",),
            vmem_limit_bytes=vmem_limit),
    )(x2d)


def _mean_last(x2d, count, block_budget, vmem_limit):
    """Row-wise mean of (K, R) dividing by `count`."""
    K, R = x2d.shape
    itemsize = x2d.dtype.itemsize
    sub = _sublane(x2d.dtype)

    # Tiny trailing R: fold p kept rows into the lane axis (free row-major
    # reshape) for lane-dense loads and a wider output.
    if R < 128 and (128 % R) == 0 and jnp.issubdtype(x2d.dtype, jnp.floating):
        p = 128 // R
        while p > 1 and (K % p) != 0:
            p //= 2
        if p > 1:
            folded = _row_mean_folded(x2d.reshape(K // p, p * R), R, p, count,
                                      block_budget, vmem_limit)
            return folded.reshape(K)

    row_bytes = (_round_up(R, 128) + 128) * itemsize
    if row_bytes * sub <= block_budget:
        return _row_mean_single(x2d, count, block_budget, vmem_limit)
    return _row_mean_chunked(x2d, count, block_budget, vmem_limit)


# ----------------------------------------------------------------------------
# Path B: reduce the sublane (middle) axis of (A, Rm, B) -- no HBM transpose,
# lane-dense output.
# ----------------------------------------------------------------------------
def _mean_mid_kernel(x_ref, o_ref, *, scale):
    # x_ref: (TA, Rm, TB); sublane-axis reduction, kept axis stays on lanes.
    s = jnp.sum(x_ref[...], axis=1, keepdims=True, dtype=jnp.float32)
    o_ref[...] = (s * scale).astype(o_ref.dtype)


def _mean_mid_acc_kernel(x_ref, o_ref, acc_ref, *, scale, rm_total, trm, need_mask):
    k = pl.program_id(2)

    @pl.when(k == 0)
    def _():
        acc_ref[...] = jnp.zeros_like(acc_ref)

    x = x_ref[...]
    if need_mask:
        # Last Rm-chunk over-runs the reduction extent: zero the padding.
        row = k * trm + lax.broadcasted_iota(jnp.int32, x.shape, 1)
        x = jnp.where(row < rm_total, x, jnp.zeros_like(x))
    acc_ref[...] += jnp.sum(x, axis=1, keepdims=True, dtype=jnp.float32)

    @pl.when(k == pl.num_programs(2) - 1)
    def _():
        o_ref[...] = (acc_ref[...] * scale).astype(o_ref.dtype)


def _mean_middle(x3, count, block_budget, vmem_limit):
    """(A, Rm, B) -> (A, B) mean over the middle axis, streamed once."""
    A, Rm, B = x3.shape
    itemsize = x3.dtype.itemsize
    sub = _sublane(x3.dtype)
    rm_pad = _round_up(Rm, sub)
    scale = 1.0 / float(count)

    # Bytes for one (1, Rm, 128) input lane-slab plus its output slab.
    col_bytes = (rm_pad + sub) * 128 * itemsize
    if col_bytes <= block_budget:
        # Whole reduction extent fits in one block: single pass, no scratch.
        if B <= 128:
            TB = B
        else:
            tb_budget = (block_budget // ((rm_pad + sub) * itemsize)) // 128 * 128
            TB = min(_round_up(B, 128), max(128, tb_budget))
        TB_pad = _round_up(TB, 128)
        TA = max(1, block_budget // ((rm_pad + sub) * TB_pad * itemsize))
        TA = min(TA, A)
        if pl.cdiv(A, TA) * pl.cdiv(B, TB) < 2 and A >= 2:
            TA = pl.cdiv(A, 2)           # >= 2 parallel steps for v7x megacore
        kernel = functools.partial(_mean_mid_kernel, scale=scale)
        out = pl.pallas_call(
            kernel,
            out_shape=jax.ShapeDtypeStruct((A, 1, B), x3.dtype),
            grid_spec=pltpu.PrefetchScalarGridSpec(
                num_scalar_prefetch=0,
                grid=(pl.cdiv(A, TA), pl.cdiv(B, TB)),
                in_specs=[pl.BlockSpec((TA, Rm, TB), lambda a, b: (a, 0, b))],
                out_specs=pl.BlockSpec((TA, 1, TB), lambda a, b: (a, 0, b)),
            ),
            compiler_params=pltpu.CompilerParams(
                dimension_semantics=("parallel", "parallel"),
                vmem_limit_bytes=vmem_limit),
        )(x3)
        return out[:, 0, :]

    # Reduction extent too large for one block: tile Rm along a trailing
    # "arbitrary" grid axis and accumulate in a resident f32 VMEM scratch
    # (still no HBM transpose; input streamed exactly once).
    TB = B if B <= 128 else 128
    TB_pad = _round_up(TB, 128)
    TRm = max(sub, (block_budget // (2 * TB_pad * itemsize)) // sub * sub)
    TRm = min(TRm, rm_pad)
    per_ta = (TRm + sub) * TB_pad * itemsize + 8 * TB_pad * 4
    TA = max(1, min(A, block_budget // per_ta))
    need_mask = (Rm % TRm) != 0
    kernel = functools.partial(_mean_mid_acc_kernel, scale=scale,
                               rm_total=Rm, trm=TRm, need_mask=need_mask)
    out = pl.pallas_call(
        kernel,
        out_shape=jax.ShapeDtypeStruct((A, 1, B), x3.dtype),
        grid_spec=pltpu.PrefetchScalarGridSpec(
            num_scalar_prefetch=0,
            grid=(pl.cdiv(A, TA), pl.cdiv(B, TB), pl.cdiv(Rm, TRm)),
            in_specs=[pl.BlockSpec((TA, TRm, TB), lambda a, b, k: (a, k, b))],
            out_specs=pl.BlockSpec((TA, 1, TB), lambda a, b, k: (a, 0, b)),
            scratch_shapes=[pltpu.VMEM((TA, 1, TB), jnp.float32)],
        ),
        compiler_params=pltpu.CompilerParams(
            dimension_semantics=("parallel", "parallel", "arbitrary"),
            vmem_limit_bytes=vmem_limit),
    )(x3)
    return out[:, 0, :]


# ----------------------------------------------------------------------------
# Public wrapper (equivalent of torch.Tensor.mean(dim, keepdim)).
# ----------------------------------------------------------------------------
def mean_pallas(x, dim, keep_dim=False, *, block_budget=None, vmem_limit=None):
    ndim = x.ndim
    dims = (dim,) if isinstance(dim, int) else tuple(dim)
    dims = tuple(sorted(set(d % ndim for d in dims)))
    kept = tuple(a for a in range(ndim) if a not in dims)
    kept_shape = tuple(x.shape[a] for a in kept)
    red_count = math.prod(x.shape[d] for d in dims)
    out_shape = (tuple(1 if a in dims else x.shape[a] for a in range(ndim))
                 if keep_dim else kept_shape)

    bb, vl = _budgets()
    if block_budget is not None:
        bb = block_budget
    if vmem_limit is not None:
        vl = vmem_limit

    contiguous = dims == tuple(range(dims[0], dims[-1] + 1))
    if contiguous and dims[-1] != ndim - 1:
        # Middle-axis reduction: free reshape, no HBM transpose, lane-dense out.
        A = math.prod(x.shape[:dims[0]])
        B = math.prod(x.shape[dims[-1] + 1:])
        flat = _mean_middle(x.reshape(A, red_count, B), red_count, bb, vl)
        flat = flat.reshape(-1)
    else:
        # General path: reduced axes last (transpose only when non-trailing).
        perm = kept + dims
        xp = x if perm == tuple(range(ndim)) else jnp.transpose(x, perm)
        K = math.prod(kept_shape) if kept_shape else 1
        flat = _mean_last(xp.reshape(K, red_count), red_count, bb, vl)
    return flat.reshape(out_shape)


if __name__ == "__main__":
    key = jax.random.PRNGKey(0)
    k0, k1, k2 = jax.random.split(key, 3)
    x = jax.random.normal(k0, (2, 4, 16, 16), dtype=jnp.float32)  # NCHW

    # 1) Mean over spatial dims (trailing reduction, single-block lane path).
    out = mean_pallas(x, dim=(2, 3), keep_dim=False)
    jax.block_until_ready(out)
    ref = jnp.mean(x, axis=(2, 3))
    assert out.shape == ref.shape, (out.shape, ref.shape)
    assert jnp.allclose(out, ref, atol=1e-5, rtol=1e-5), "mismatch dim=(2,3)"

    # 2) Mean over channel dim (middle reduction, transpose-free sublane path).
    out2 = mean_pallas(x, dim=1, keep_dim=True)
    jax.block_until_ready(out2)
    ref2 = jnp.mean(x, axis=1, keepdims=True)
    assert out2.shape == ref2.shape, (out2.shape, ref2.shape)
    assert jnp.allclose(out2, ref2, atol=1e-5, rtol=1e-5), "mismatch dim=1"

    # 3) Negative dim, tiny trailing axis -> folded lane-dense path.
    out3 = mean_pallas(x, dim=-1, keep_dim=False)
    jax.block_until_ready(out3)
    ref3 = jnp.mean(x, axis=-1)
    assert out3.shape == ref3.shape, (out3.shape, ref3.shape)
    assert jnp.allclose(out3, ref3, atol=1e-4, rtol=1e-4), "mismatch dim=-1"

    # 4) Force the chunked-R streaming-accumulator path (with lane masking).
    xw = jax.random.normal(k1, (8, 1000), dtype=jnp.float32)
    out4 = mean_pallas(xw, dim=1, block_budget=16 * 1024)
    jax.block_until_ready(out4)
    ref4 = jnp.mean(xw, axis=1)
    assert out4.shape == ref4.shape, (out4.shape, ref4.shape)
    assert jnp.allclose(out4, ref4, atol=1e-5, rtol=1e-4), "mismatch chunked R"

    # 5) Force the chunked middle-axis path (with sublane masking).
    xm = jax.random.normal(k2, (2, 60, 256), dtype=jnp.float32)
    out5 = mean_pallas(xm, dim=1, block_budget=16 * 1024)
    jax.block_until_ready(out5)
    ref5 = jnp.mean(xm, axis=1)
    assert out5.shape == ref5.shape, (out5.shape, ref5.shape)
    assert jnp.allclose(out5, ref5, atol=1e-5, rtol=1e-4), "mismatch chunked Rm"

    # 6) bfloat16 input (16-row sublane tiling path).
    xb = x.astype(jnp.bfloat16)
    out6 = mean_pallas(xb, dim=(2, 3), keep_dim=False)
    jax.block_until_ready(out6)
    ref6 = jnp.mean(xb.astype(jnp.float32), axis=(2, 3)).astype(jnp.bfloat16)
    assert out6.shape == ref6.shape, (out6.shape, ref6.shape)
    assert jnp.allclose(out6.astype(jnp.float32), ref6.astype(jnp.float32),
                        atol=2e-2, rtol=2e-2), "mismatch bf16"

    print("KERNEL_OK")
</pallas_src>

<mosaic_0001>
module attributes {stable_mosaic.version = 11 : i64} {
  func.func @_mean_rows_kernel(%arg0: i32, %arg1: memref<8x256xf32, #tpu.memory_space<vmem>>, %arg2: memref<8x1xf32, #tpu.memory_space<vmem>>) attributes {dimension_semantics = [#tpu.dimension_semantics<parallel>], iteration_bounds = array<i64: 1>, scalar_prefetch = 0 : i64, scratch_operands = 0 : i64, tpu.core_type = #tpu.core_type<tc>, window_params = [{transform_indices = @transform_0, window_bounds = array<i64: 8, 256>}, {transform_indices = @transform_1, window_bounds = array<i64: 8, 1>}]} {
    %c0 = arith.constant 0 : index
    %c0_0 = arith.constant 0 : index
    %0 = vector.load %arg1[%c0, %c0_0] : memref<8x256xf32, #tpu.memory_space<vmem>>, vector<8x256xf32>
    %cst = arith.constant dense<0.000000e+00> : vector<8xf32>
    %1 = vector.multi_reduction <add>, %0, %cst [1] : vector<8x256xf32> to vector<8xf32>
    %2 = vector.shape_cast %1 : vector<8xf32> to vector<8x1xf32>
    %cst_1 = arith.constant 3.906250e-03 : f32
    %3 = vector.broadcast %cst_1 : f32 to vector<8x1xf32>
    %4 = arith.mulf %2, %3 : vector<8x1xf32>
    %c0_2 = arith.constant 0 : index
    %c0_3 = arith.constant 0 : index
    %5 = vector.load %arg2[%c0_2, %c0_3] : memref<8x1xf32, #tpu.memory_space<vmem>>, vector<8x1xf32>
    tpu.vector_store %arg2[%c0_2, %c0_3], %4 {strides = array<i32>} : memref<8x1xf32, #tpu.memory_space<vmem>>, vector<8x1xf32>,
    return
  }
  func.func @transform_0(%arg0: i32) -> (i32, i32) {
    %c0_i32 = arith.constant 0 : i32
    %c0_i32_0 = arith.constant 0 : i32
    return %arg0, %c0_i32 : i32, i32
  }
  func.func @transform_1(%arg0: i32) -> (i32, i32) {
    %c0_i32 = arith.constant 0 : i32
    %c0_i32_0 = arith.constant 0 : i32
    return %arg0, %c0_i32 : i32, i32
  }
}

</mosaic_0001>

<llo_original>
// kernel: tpu_custom_call.1
$region0: #{tpu_custom_call.1}
  #allocation0 [shape = 'u32[]', space=smem, size = 0x4, offset = 0x4, fixed_abs, tag = 'smem constant byte address 0x4 - core index']
  #allocation1 [shape = 'u32[144,128]{1,0:T(1,128)}', space=vmem, size = 0x12000, scoped, tag = 'internal scratch']
  %s0 = inlined_call_operand.hbm [shape: f32[8,256], index: 0, kind: input, shape index: {}]
  %s1 = inlined_call_operand.vmem [shape: f32[8,1], index: 1, kind: output, shape index: {}]
  %s2 = sld [smem:[#allocation0]]
  $region18: #{tpu_custom_call.1} parent=0
    _
  %s4 = ssub.s32 1, %s2
  %s5 = scalar_select 0, %s4, %s2
  $region1: #{tpu_custom_call.1} parent=0
    #allocation2 [shape = 'u8[8192]{0}', space=vmem, size = 0x2000, scoped, tag = 'input window, operand 0, single buffered']
    #allocation3 [shape = 's32[1]{0}', space=sflag, size = 0x4, scoped, tag = 'scoped memory for tpu_custom_call.1']
    %6 = vsyncpa [#allocation3], 0
    // Predicated region
    $region2: #{tpu_custom_call.1} parent=1 // pred_check
      _
    $region3: #{tpu_custom_call.1} parent=1 // pred_check_branch
      %8 = sbr.rel (0) target = $region5
    $region4: #{tpu_custom_call.1} parent=1 // pred_region
      %s10 = ssub.s32 256, 256
      %11 = vsyncadd [#allocation3], %s10
      %s13 = sshll.u32 [#allocation2], 4
      %s14 = int_to_ptr.vmem [resolvable:$true] %s13
      %16 = dma.hbm_to_vmem [thread:$0]  %s0, 256, %s14, [#allocation3]
    $region5: #{tpu_custom_call.1} parent=1 // pred_fallthru
      _
    // Predicated region
    $region6: #{tpu_custom_call.1} parent=1 // pred_check
      _
    $region7: #{tpu_custom_call.1} parent=1 // pred_check_branch
      %18 = sbr.rel (0) target = $region9
    $region8: #{tpu_custom_call.1} parent=1 // pred_region
      %19 = dma.done [#allocation3], 256
    $region9: #{tpu_custom_call.1} parent=1 // pred_fallthru
      _
    %v20 = vld [vmem:[#allocation2] sm:$0xff]
    %v21 = vld [vmem:[#allocation2 + $0x8] sm:$0xff]
    %v22 = vadd.f32 %v20, %v21
    %23 = vadd.xlane.f32.xlu0 %v22
    %v24 = vpop.xlane.xlu0 %23
    %v25 = vmul.f32 %v24, 0.00390625
    %vm26 = vcmask 7168
    %27 = vst.msk [vmem:[%s1] sm:$0xff] %vm26, %v25
    // Predicated region
    $region10: #{tpu_custom_call.1} parent=1 // pred_check
      _
    $region11: #{tpu_custom_call.1} parent=1 // pred_check_branch
      %29 = sbr.rel (0) target = $region13
    $region12: #{tpu_custom_call.1} parent=1 // pred_region
      _
    $region13: #{tpu_custom_call.1} parent=1 // pred_fallthru
      _
    // Predicated region
    $region14: #{tpu_custom_call.1} parent=1 // pred_check
      _
    $region15: #{tpu_custom_call.1} parent=1 // pred_check_branch
      %31 = sbr.rel (0) target = $region17
    $region16: #{tpu_custom_call.1} parent=1 // pred_region
      _
    $region17: #{tpu_custom_call.1} parent=1 // pred_fallthru
      _
    %32 = vsyncpa [#allocation3], 1

</llo_original>
